<compile_context>
chip_gen: v7x
topology: tpu7x:2x2x1
jax: 0.10.0
libtpu: 0.0.40
codegen_flags: <defaults>
</compile_context>

<pallas_src>
import jax
import jax.numpy as jnp
from jax.experimental import pallas as pl
from jax.experimental.pallas import tpu as pltpu


_LANE = 512                 # lane-dense last dim (multiple of 128)
_MAX_BLOCK_ROWS = 1024      # (1024, 512) f32 tile = 2 MiB per buffer
_MIN_PALLAS_ELEMS = 1 << 16  # below this, pallas launch overhead dominates
_VMEM_LIMIT_BYTES = 48 * 1024 * 1024  # fits every generation's physical VMEM


def _round_up(x: int, m: int) -> int:
    return ((x + m - 1) // m) * m


def _choose_block_rows(rows: int) -> int:
    """Pick a block row count: big tiles, but always >=2 tiles when possible."""
    if rows <= 16:
        # Tiny slab: one full-array block (block dim may equal the array dim).
        return rows
    # Aim for at least two tiles so v7x's two TensorCores both get work, while
    # capping live VMEM (4 streams x 2 buffers x block_rows x 512 x 4B).
    target = min(_MAX_BLOCK_ROWS, pl.cdiv(rows, 2))
    return _round_up(target, 8)


def _sampler_kernel(z_mean_ref, z_log_var_ref, eps_ref, out_ref):
    zm = z_mean_ref[...].astype(jnp.float32)
    zlv = z_log_var_ref[...].astype(jnp.float32)
    eps = eps_ref[...].astype(jnp.float32)
    out_ref[...] = (zm + jnp.exp(0.5 * zlv) * eps).astype(out_ref.dtype)


def sampler(z_mean, z_log_var, key=None, epsilon=None, *, force_pallas=False):
    """Pallas implementation of Sampler.forward.

    out = z_mean + exp(0.5 * z_log_var) * epsilon, epsilon ~ N(0, 1).

    If `epsilon` is None it is drawn from `key` with jax.random.normal (same
    distribution as torch.randn; bit-exact parity with torch is impossible).
    """
    assert z_mean.shape == z_log_var.shape
    assert z_mean.dtype == z_log_var.dtype
    shape = z_mean.shape
    dtype = z_mean.dtype
    n = 1
    for d in shape:
        n *= d

    if epsilon is None:
        assert key is not None, "provide either `key` or `epsilon`"
        epsilon = jax.random.normal(key, shape, dtype=dtype)
    assert epsilon.shape == shape

    # Small-size fallback: a standalone pallas_call is pure overhead here.
    if n < _MIN_PALLAS_ELEMS and not force_pallas:
        return (z_mean + jnp.exp(0.5 * z_log_var) * epsilon).astype(dtype)

    # Lane-dense slab: flatten to (rows, 512).  For lane-aligned n this is a
    # free reshape; otherwise pad at most 511 elements.
    rows = pl.cdiv(n, _LANE)
    pad = rows * _LANE - n

    def to_slab(x):
        xf = x.reshape(-1)
        if pad:
            xf = jnp.pad(xf, (0, pad))
        return xf.reshape(rows, _LANE)

    zm2d = to_slab(z_mean)
    zlv2d = to_slab(z_log_var)
    eps2d = to_slab(epsilon)

    block_rows = _choose_block_rows(rows)
    grid = pl.cdiv(rows, block_rows)   # ragged last block is masked by Pallas
    block = pl.BlockSpec((block_rows, _LANE), lambda i: (i, 0))

    out2d = pl.pallas_call(
        _sampler_kernel,
        out_shape=jax.ShapeDtypeStruct((rows, _LANE), dtype),
        grid=(grid,),
        in_specs=[block, block, block],
        out_specs=block,
        compiler_params=pltpu.CompilerParams(
            dimension_semantics=("parallel",),
            vmem_limit_bytes=_VMEM_LIMIT_BYTES,
        ),
    )(zm2d, zlv2d, eps2d)

    out = out2d.reshape(-1)
    if pad:
        out = out[:n]
    return out.reshape(shape)


if __name__ == "__main__":
    latent_dim = 2
    batch_size = 8

    key = jax.random.PRNGKey(0)
    k_mean, k_logvar, k_eps, k_big = jax.random.split(key, 4)

    z_mean = jax.random.normal(k_mean, (batch_size, latent_dim), dtype=jnp.float32)
    z_log_var = jax.random.normal(k_logvar, (batch_size, latent_dim), dtype=jnp.float32)

    # --- module-sized case (auto path: small-size fallback) ----------------
    out_small = jax.block_until_ready(sampler(z_mean, z_log_var, key=k_eps))
    assert out_small.shape == (batch_size, latent_dim)
    assert out_small.dtype == jnp.float32
    assert bool(jnp.all(jnp.isfinite(out_small)))
    # Determinism: same key -> identical output.
    out_small2 = jax.block_until_ready(sampler(z_mean, z_log_var, key=k_eps))
    assert bool(jnp.array_equal(out_small, out_small2))

    # --- same small case, forced through the Pallas kernel, exact parity ---
    eps_small = jax.random.normal(k_eps, (batch_size, latent_dim), dtype=jnp.float32)
    out_pk = jax.block_until_ready(
        sampler(z_mean, z_log_var, epsilon=eps_small, force_pallas=True)
    )
    ref_small = z_mean + jnp.exp(0.5 * z_log_var) * eps_small
    assert out_pk.shape == ref_small.shape
    assert bool(jnp.allclose(out_pk, ref_small, atol=1e-6, rtol=1e-6))

    # --- larger, multi-tile, lane-aligned case through the Pallas path -----
    big_b, big_d = 512, 512  # n = 262144 -> rows = 512, block_rows = 256, grid = 2
    zm_big = jax.random.normal(jax.random.fold_in(k_big, 0), (big_b, big_d), jnp.float32)
    zlv_big = 0.1 * jax.random.normal(jax.random.fold_in(k_big, 1), (big_b, big_d), jnp.float32)
    eps_big = jax.random.normal(jax.random.fold_in(k_big, 2), (big_b, big_d), jnp.float32)
    out_big = jax.block_until_ready(sampler(zm_big, zlv_big, epsilon=eps_big))
    ref_big = zm_big + jnp.exp(0.5 * zlv_big) * eps_big
    assert out_big.shape == (big_b, big_d)
    assert bool(jnp.all(jnp.isfinite(out_big)))
    assert bool(jnp.allclose(out_big, ref_big, atol=1e-5, rtol=1e-5))

    print("KERNEL_OK")
</pallas_src>

<mosaic_0001>
module attributes {stable_mosaic.version = 11 : i64} {
  func.func @_sampler_kernel(%arg0: i32, %arg1: memref<1x512xf32, #tpu.memory_space<vmem>>, %arg2: memref<1x512xf32, #tpu.memory_space<vmem>>, %arg3: memref<1x512xf32, #tpu.memory_space<vmem>>, %arg4: memref<1x512xf32, #tpu.memory_space<vmem>>) attributes {dimension_semantics = [#tpu.dimension_semantics<parallel>], iteration_bounds = array<i64: 1>, scalar_prefetch = 0 : i64, scratch_operands = 0 : i64, tpu.core_type = #tpu.core_type<tc>, window_params = [{transform_indices = @transform_0, window_bounds = array<i64: 1, 512>}, {transform_indices = @transform_1, window_bounds = array<i64: 1, 512>}, {transform_indices = @transform_2, window_bounds = array<i64: 1, 512>}, {transform_indices = @transform_3, window_bounds = array<i64: 1, 512>}]} {
    %c0 = arith.constant 0 : index
    %c0_0 = arith.constant 0 : index
    %0 = vector.load %arg1[%c0, %c0_0] : memref<1x512xf32, #tpu.memory_space<vmem>>, vector<1x512xf32>
    %c0_1 = arith.constant 0 : index
    %c0_2 = arith.constant 0 : index
    %1 = vector.load %arg2[%c0_1, %c0_2] : memref<1x512xf32, #tpu.memory_space<vmem>>, vector<1x512xf32>
    %c0_3 = arith.constant 0 : index
    %c0_4 = arith.constant 0 : index
    %2 = vector.load %arg3[%c0_3, %c0_4] : memref<1x512xf32, #tpu.memory_space<vmem>>, vector<1x512xf32>
    %cst = arith.constant 5.000000e-01 : f32
    %3 = vector.broadcast %cst : f32 to vector<1x512xf32>
    %4 = arith.mulf %3, %1 : vector<1x512xf32>
    %5 = math.exp %4 : vector<1x512xf32>
    %6 = arith.mulf %5, %2 : vector<1x512xf32>
    %7 = arith.addf %0, %6 : vector<1x512xf32>
    %c0_5 = arith.constant 0 : index
    %c0_6 = arith.constant 0 : index
    %8 = vector.load %arg4[%c0_5, %c0_6] : memref<1x512xf32, #tpu.memory_space<vmem>>, vector<1x512xf32>
    tpu.vector_store %arg4[%c0_5, %c0_6], %7 {strides = array<i32>} : memref<1x512xf32, #tpu.memory_space<vmem>>, vector<1x512xf32>,
    return
  }
  func.func @transform_0(%arg0: i32) -> (i32, i32) {
    %c0_i32 = arith.constant 0 : i32
    %c0_i32_0 = arith.constant 0 : i32
    return %arg0, %c0_i32 : i32, i32
  }
  func.func @transform_1(%arg0: i32) -> (i32, i32) {
    %c0_i32 = arith.constant 0 : i32
    %c0_i32_0 = arith.constant 0 : i32
    return %arg0, %c0_i32 : i32, i32
  }
  func.func @transform_2(%arg0: i32) -> (i32, i32) {
    %c0_i32 = arith.constant 0 : i32
    %c0_i32_0 = arith.constant 0 : i32
    return %arg0, %c0_i32 : i32, i32
  }
  func.func @transform_3(%arg0: i32) -> (i32, i32) {
    %c0_i32 = arith.constant 0 : i32
    %c0_i32_0 = arith.constant 0 : i32
    return %arg0, %c0_i32 : i32, i32
  }
}

</mosaic_0001>

<llo_original>
// kernel: tpu_custom_call.1
$region0: #{tpu_custom_call.1}
  #allocation0 [shape = 'u32[]', space=smem, size = 0x4, offset = 0x4, fixed_abs, tag = 'smem constant byte address 0x4 - core index']
  #allocation1 [shape = 'u32[144,128]{1,0:T(1,128)}', space=vmem, size = 0x12000, scoped, tag = 'internal scratch']
  %s0 = inlined_call_operand.hbm [shape: f32[1,512], index: 0, kind: input, shape index: {}]
  %s1 = inlined_call_operand.hbm [shape: f32[1,512], index: 1, kind: input, shape index: {}]
  %s2 = inlined_call_operand.vmem [shape: f32[1,512], index: 2, kind: input, shape index: {}]
  %s3 = inlined_call_operand.hbm [shape: f32[1,512], index: 3, kind: output, shape index: {}]
  %s4 = sld [smem:[#allocation0]]
  $region30: #{tpu_custom_call.1} parent=0
    _
  %s6 = ssub.s32 1, %s4
  %s7 = scalar_select 0, %s6, %s4
  $region1: #{tpu_custom_call.1} parent=0
    #allocation2 [shape = 'u8[2048]{0}', space=vmem, size = 0x800, scoped, tag = 'input window, operand 0, single buffered']
    #allocation3 [shape = 's32[1]{0}', space=sflag, size = 0x4, scoped, tag = 'scoped memory for tpu_custom_call.1']
    #allocation4 [shape = 's32[1]{0}', space=sflag, size = 0x4, scoped, tag = 'scoped memory for tpu_custom_call.1']
    #allocation5 [shape = 'u8[2048]{0}', space=vmem, size = 0x800, scoped, tag = 'input window, operand 1, single buffered']
    #allocation6 [shape = 's32[1]{0}', space=sflag, size = 0x4, scoped, tag = 'scoped memory for tpu_custom_call.1']
    #allocation7 [shape = 'u8[2048]{0}', space=vmem, size = 0x800, scoped, tag = 'output window, operand 0, single buffered']
    %8 = vsyncpa [#allocation3], 0
    %9 = vsyncpa [#allocation6], 0
    %10 = vsyncpa [#allocation4], 0
    // Predicated region
    $region2: #{tpu_custom_call.1} parent=1 // pred_check
      _
    $region3: #{tpu_custom_call.1} parent=1 // pred_check_branch
      %12 = sbr.rel (0) target = $region5
    $region4: #{tpu_custom_call.1} parent=1 // pred_region
      %s14 = ssub.s32 64, 64
      %15 = vsyncadd [#allocation3], %s14
      %s17 = sshll.u32 [#allocation2], 4
      %s18 = int_to_ptr.vmem [resolvable:$true] %s17
      %20 = dma.hbm_to_vmem [thread:$0]  %s0, 64, %s18, [#allocation3]
    $region5: #{tpu_custom_call.1} parent=1 // pred_fallthru
      _
    // Predicated region
    $region6: #{tpu_custom_call.1} parent=1 // pred_check
      _
    $region7: #{tpu_custom_call.1} parent=1 // pred_check_branch
      %22 = sbr.rel (0) target = $region9
    $region8: #{tpu_custom_call.1} parent=1 // pred_region
      %s24 = ssub.s32 64, 64
      %25 = vsyncadd [#allocation6], %s24
      %s27 = sshll.u32 [#allocation5], 4
      %s28 = int_to_ptr.vmem [resolvable:$true] %s27
      %30 = dma.hbm_to_vmem [thread:$0]  %s1, 64, %s28, [#allocation6]
    $region9: #{tpu_custom_call.1} parent=1 // pred_fallthru
      _
    // Predicated region
    $region10: #{tpu_custom_call.1} parent=1 // pred_check
      _
    $region11: #{tpu_custom_call.1} parent=1 // pred_check_branch
      %32 = sbr.rel (0) target = $region13
    $region12: #{tpu_custom_call.1} parent=1 // pred_region
      _
    $region13: #{tpu_custom_call.1} parent=1 // pred_fallthru
      _
    // Predicated region
    $region14: #{tpu_custom_call.1} parent=1 // pred_check
      _
    $region15: #{tpu_custom_call.1} parent=1 // pred_check_branch
      %34 = sbr.rel (0) target = $region17
    $region16: #{tpu_custom_call.1} parent=1 // pred_region
      %35 = dma.done [#allocation3], 64
    $region17: #{tpu_custom_call.1} parent=1 // pred_fallthru
      _
    // Predicated region
    $region18: #{tpu_custom_call.1} parent=1 // pred_check
      _
    $region19: #{tpu_custom_call.1} parent=1 // pred_check_branch
      %37 = sbr.rel (0) target = $region21
    $region20: #{tpu_custom_call.1} parent=1 // pred_region
      %38 = dma.done [#allocation6], 64
    $region21: #{tpu_custom_call.1} parent=1 // pred_fallthru
      _
    %v39 = vld [vmem:[#allocation2] sm:$0xf]
    %v40 = vld [vmem:[#allocation5] sm:$0xf]
    %v41 = vld [vmem:[%s2] sm:$0xf]
    %v42 = vmul.f32 %v40, 0.5
    %v43 = vmul.f32 %v42, 1.442695
    %v44 = vpow.pop %v43
    %v45 = vmul.f32 %v44, %v41
    %v46 = vadd.f32 %v39, %v45
    %v47 = vlaneseq
    %vm48 = vcmp.ge.s32.totalorder %v47, 0
    %vm49 = vcmp.lt.s32.totalorder %v47, 512
    %vm50 = vmand %vm48, %vm49
    %51 = vst.msk [vmem:[#allocation7] sm:$0xf] %vm50, %v46
    // Predicated region
    $region22: #{tpu_custom_call.1} parent=1 // pred_check
      _
    $region23: #{tpu_custom_call.1} parent=1 // pred_check_branch
      %53 = sbr.rel (0) target = $region25
    $region24: #{tpu_custom_call.1} parent=1 // pred_region
      %s55 = ssub.s32 64, 64
      %56 = vsyncadd [#allocation4], %s55
      %s58 = sshll.u32 [#allocation7], 4
      %s59 = int_to_ptr.vmem [resolvable:$true] %s58
      %61 = dma.vmem_to_hbm [thread:$0]  %s59, 64, %s3, [#allocation4]
    $region25: #{tpu_custom_call.1} parent=1 // pred_fallthru
      _
    // Predicated region
    $region26: #{tpu_custom_call.1} parent=1 // pred_check
      _
    $region27: #{tpu_custom_call.1} parent=1 // pred_check_branch
      %63 = sbr.rel (0) target = $region29
    $region28: #{tpu_custom_call.1} parent=1 // pred_region
      %64 = dma.done [#allocation4], 64
    $region29: #{tpu_custom_call.1} parent=1 // pred_fallthru
      _
    %65 = vsyncpa [#allocation3], 1
    %66 = vsyncpa [#allocation6], 1
    %67 = vsyncpa [#allocation4], 1

</llo_original>
